<compile_context>
chip_gen: v7x
topology: tpu7x:2x2x1
jax: 0.10.0
libtpu: 0.0.40
codegen_flags: <defaults>
</compile_context>

<pallas_src>
import functools
import math

import jax
import jax.numpy as jnp
from jax.experimental import pallas as pl
from jax.experimental.pallas import tpu as pltpu

_LANE = 128
_MIN_CHUNK_BYTES = 512        # minimum contiguous per-row DMA chunk (two-view path)
_FUSED_STEP_CAP = 16 << 20    # max (input+output) bytes per fused grid step
                              # (double-buffered ~32 MiB -> fits v7x's 64 MiB physical VMEM)


def _glu_fused_kernel(x_ref, o_ref, *, split):
    # x block is (rows, 2*split): [ a | gate ] contiguous along the last dim.
    a = x_ref[:, :split]
    g = x_ref[:, split:]
    gate = jax.nn.sigmoid(g.astype(jnp.float32))      # f32 sigmoid (EUP slot; free here)
    o_ref[...] = (a.astype(jnp.float32) * gate).astype(o_ref.dtype)


def _glu_two_view_kernel(a_ref, b_ref, o_ref):
    gate = jax.nn.sigmoid(b_ref[...].astype(jnp.float32))
    o_ref[...] = (a_ref[...].astype(jnp.float32) * gate).astype(o_ref.dtype)


def _largest_aligned_divisor(f: int, cap: int) -> int:
    """Largest multiple of 128 that divides f and is <= cap (requires f % 128 == 0)."""
    g = f // _LANE
    cap_g = max(1, cap // _LANE)
    for d in range(min(g, cap_g), 0, -1):
        if g % d == 0:
            return d * _LANE
    return _LANE


def _round_rows(outer: int, rows_target: int, sub: int) -> int:
    """Round a row-block target down to the packed sublane tile; full dim if small."""
    rows_target = max(sub, (rows_target // sub) * sub)
    return outer if outer <= rows_target else rows_target


def glu(x: jax.Array, dim: int, *, target_block_bytes: int = 2 << 20) -> jax.Array:
    """GLU along `dim`: a, gate = split(x, 2, dim); return a * sigmoid(gate)."""
    ndim = x.ndim
    dim = dim % ndim
    size = x.shape[dim]
    assert size % 2 == 0, "GLU split dimension must have even extent"
    half = size // 2

    outer = math.prod(x.shape[:dim])
    inner = math.prod(x.shape[dim + 1:])
    f = half * inner                                   # elements per half, per outer-row
    out_shape = x.shape[:dim] + (half,) + x.shape[dim + 1:]
    dtype = x.dtype
    itemsize = jnp.dtype(dtype).itemsize
    sub = max(8, 32 // itemsize)                       # packed sublane tile: 8 f32 / 16 bf16 / 32 int8

    # Free, contiguous reshape: halves along `dim` become column ranges [0,f) / [f,2f).
    x2 = x.reshape(outer, 2 * f)

    cost = pl.CostEstimate(flops=2 * outer * f,
                           transcendentals=outer * f,
                           bytes_accessed=3 * outer * f * itemsize)

    aligned = (f % _LANE == 0)

    # ---- Path selection -------------------------------------------------------
    use_two_view = False
    tile_cols = f
    if aligned and f * itemsize * sub > target_block_bytes:
        # Half-row too wide for one target-sized block: column-split, two views.
        lane_cap = max(_LANE, (target_block_bytes // (sub * itemsize)) // _LANE * _LANE)
        tile_cols = _largest_aligned_divisor(f, lane_cap)
        use_two_view = True
        if tile_cols * itemsize < _MIN_CHUNK_BYTES:
            # Awkward factorization -> per-row strided chunk too small for good HBM
            # bursts; prefer a fused full-row block if a raised VMEM budget allows.
            if 3 * f * itemsize * min(outer, sub) <= _FUSED_STEP_CAP:
                use_two_view = False
                tile_cols = f

    if use_two_view:
        # ---- Two strided views of the same HBM array (zero copies) ----
        tile_rows = _round_rows(outer, target_block_bytes // (tile_cols * itemsize), sub)
        row_blocks = pl.cdiv(outer, tile_rows)
        col_blocks = f // tile_cols
        step_bytes = 3 * tile_rows * tile_cols * itemsize

        if row_blocks >= col_blocks:
            grid = (row_blocks, col_blocks)
            a_map = lambda i, j: (i, j)
            b_map = lambda i, j: (i, j + col_blocks)
            o_map = lambda i, j: (i, j)
        else:
            # Put the axis with the most blocks first so both v7x TensorCores get work.
            grid = (col_blocks, row_blocks)
            a_map = lambda j, i: (i, j)
            b_map = lambda j, i: (i, j + col_blocks)
            o_map = lambda j, i: (i, j)

        out2 = pl.pallas_call(
            _glu_two_view_kernel,
            out_shape=jax.ShapeDtypeStruct((outer, f), dtype),
            grid=grid,
            in_specs=[
                pl.BlockSpec((tile_rows, tile_cols), a_map),
                pl.BlockSpec((tile_rows, tile_cols), b_map),
            ],
            out_specs=pl.BlockSpec((tile_rows, tile_cols), o_map),
            compiler_params=pltpu.CompilerParams(
                dimension_semantics=("parallel", "parallel"),
                vmem_limit_bytes=max(2 * step_bytes + (4 << 20), 16 << 20)),
            cost_estimate=cost,
        )(x2, x2)
        return out2.reshape(out_shape)

    # ---- Fused full-row path: one contiguous input block per grid step ----
    # Works for any f (full last dim satisfies the layout rule even when
    # f % 128 != 0); the split inside the kernel is static.
    if 3 * f * itemsize * min(outer, sub) > _FUSED_STEP_CAP:
        # TODO(synk): pathological huge lane-unaligned split width with awkward
        # factors — fall back to plain XLA rather than risk a VMEM OOM.
        a, b = jnp.split(x2, 2, axis=1)
        y = (a.astype(jnp.float32) * jax.nn.sigmoid(b.astype(jnp.float32))).astype(dtype)
        return y.reshape(out_shape)

    tile_rows = _round_rows(outer, target_block_bytes // max(1, f * itemsize), sub)
    row_blocks = pl.cdiv(outer, tile_rows)
    step_bytes = 3 * tile_rows * f * itemsize

    out2 = pl.pallas_call(
        functools.partial(_glu_fused_kernel, split=f),
        out_shape=jax.ShapeDtypeStruct((outer, f), dtype),
        grid=(row_blocks,),
        in_specs=[pl.BlockSpec((tile_rows, 2 * f), lambda i: (i, 0))],
        out_specs=pl.BlockSpec((tile_rows, f), lambda i: (i, 0)),
        compiler_params=pltpu.CompilerParams(
            dimension_semantics=("parallel",),
            vmem_limit_bytes=max(2 * step_bytes + (4 << 20), 16 << 20)),
        cost_estimate=cost,
    )(x2)
    return out2.reshape(out_shape)


def _ref_glu(x, dim):
    a, b = jnp.split(x, 2, axis=dim)
    return (a.astype(jnp.float32) * jax.nn.sigmoid(b.astype(jnp.float32))).astype(x.dtype)


if __name__ == "__main__":
    key = jax.random.PRNGKey(0)
    k1, k2, k3 = jax.random.split(key, 3)

    # 1) Conformer conv-module style input: GLU over the channel dim (dim=1).
    #    (aligned, fused full-row path)
    x1 = jax.random.normal(k1, (2, 4, 16, 16), dtype=jnp.float32)
    y1 = glu(x1, 1)
    jax.block_until_ready(y1)
    r1 = _ref_glu(x1, 1)
    assert y1.shape == r1.shape and y1.dtype == x1.dtype
    assert jnp.allclose(y1, r1, atol=1e-5, rtol=1e-5)

    # 2) Wide last-dim GLU with a small block budget to exercise the
    #    two-view column-split path.
    x2 = jax.random.normal(k2, (64, 2048), dtype=jnp.float32)
    y2 = glu(x2, -1, target_block_bytes=16384)
    jax.block_until_ready(y2)
    r2 = _ref_glu(x2, -1)
    assert y2.shape == r2.shape
    assert jnp.allclose(y2, r2, atol=1e-5, rtol=1e-5)

    # 3) Lane-unaligned split width (f % 128 != 0): fused full-row path.
    x3 = jax.random.normal(k3, (4, 10, 6), dtype=jnp.float32)
    y3 = glu(x3, 1)
    jax.block_until_ready(y3)
    r3 = _ref_glu(x3, 1)
    assert y3.shape == r3.shape
    assert jnp.allclose(y3, r3, atol=1e-5, rtol=1e-5)

    print("KERNEL_OK")
</pallas_src>

<mosaic_0001>
module attributes {stable_mosaic.version = 11 : i64} {
  func.func @_glu_fused_kernel(%arg0: i32, %arg1: memref<2x1024xf32, #tpu.memory_space<vmem>>, %arg2: memref<2x512xf32, #tpu.memory_space<vmem>>) attributes {dimension_semantics = [#tpu.dimension_semantics<parallel>], iteration_bounds = array<i64: 1>, scalar_prefetch = 0 : i64, scratch_operands = 0 : i64, tpu.core_type = #tpu.core_type<tc>, window_params = [{transform_indices = @transform_0, window_bounds = array<i64: 2, 1024>}, {transform_indices = @transform_1, window_bounds = array<i64: 2, 512>}]} {
    %c0 = arith.constant 0 : index
    %c0_0 = arith.constant 0 : index
    %0 = vector.load %arg1[%c0, %c0_0] : memref<2x1024xf32, #tpu.memory_space<vmem>>, vector<2x512xf32>
    %c0_1 = arith.constant 0 : index
    %c512 = arith.constant 512 : index
    %1 = vector.load %arg1[%c0_1, %c512] : memref<2x1024xf32, #tpu.memory_space<vmem>>, vector<2x512xf32>
    %2 = arith.negf %1 : vector<2x512xf32>
    %3 = math.exp %2 : vector<2x512xf32>
    %cst = arith.constant 1.000000e+00 : f32
    %4 = vector.broadcast %cst : f32 to vector<2x512xf32>
    %5 = arith.addf %4, %3 : vector<2x512xf32>
    %6 = arith.divf %4, %5 : vector<2x512xf32>
    %7 = arith.mulf %0, %6 : vector<2x512xf32>
    %c0_2 = arith.constant 0 : index
    %c0_3 = arith.constant 0 : index
    %8 = vector.load %arg2[%c0_2, %c0_3] : memref<2x512xf32, #tpu.memory_space<vmem>>, vector<2x512xf32>
    tpu.vector_store %arg2[%c0_2, %c0_3], %7 {strides = array<i32>} : memref<2x512xf32, #tpu.memory_space<vmem>>, vector<2x512xf32>,
    return
  }
  func.func @transform_0(%arg0: i32) -> (i32, i32) {
    %c0_i32 = arith.constant 0 : i32
    %c0_i32_0 = arith.constant 0 : i32
    return %arg0, %c0_i32 : i32, i32
  }
  func.func @transform_1(%arg0: i32) -> (i32, i32) {
    %c0_i32 = arith.constant 0 : i32
    %c0_i32_0 = arith.constant 0 : i32
    return %arg0, %c0_i32 : i32, i32
  }
}

</mosaic_0001>

<llo_original>
// kernel: tpu_custom_call.1
$region0: #{tpu_custom_call.1}
  #allocation0 [shape = 'u32[]', space=smem, size = 0x4, offset = 0x4, fixed_abs, tag = 'smem constant byte address 0x4 - core index']
  #allocation1 [shape = 'u32[144,128]{1,0:T(1,128)}', space=vmem, size = 0x12000, scoped, tag = 'internal scratch']
  %s0 = inlined_call_operand.hbm [shape: f32[2,1024], index: 0, kind: input, shape index: {}]
  %s1 = inlined_call_operand.hbm [shape: f32[2,512], index: 1, kind: output, shape index: {}]
  %s2 = sld [smem:[#allocation0]]
  $region18: #{tpu_custom_call.1} parent=0
    _
  %s4 = ssub.s32 1, %s2
  %s5 = scalar_select 0, %s4, %s2
  $region1: #{tpu_custom_call.1} parent=0
    #allocation2 [shape = 'u8[8192]{0}', space=vmem, size = 0x2000, scoped, tag = 'input window, operand 0, single buffered']
    #allocation3 [shape = 's32[1]{0}', space=sflag, size = 0x4, scoped, tag = 'scoped memory for tpu_custom_call.1']
    #allocation4 [shape = 's32[1]{0}', space=sflag, size = 0x4, scoped, tag = 'scoped memory for tpu_custom_call.1']
    #allocation5 [shape = 'u8[4096]{0}', space=vmem, size = 0x1000, scoped, tag = 'output window, operand 0, single buffered']
    %6 = vsyncpa [#allocation3], 0
    %7 = vsyncpa [#allocation4], 0
    // Predicated region
    $region2: #{tpu_custom_call.1} parent=1 // pred_check
      _
    $region3: #{tpu_custom_call.1} parent=1 // pred_check_branch
      %9 = sbr.rel (0) target = $region5
    $region4: #{tpu_custom_call.1} parent=1 // pred_region
      %s11 = ssub.s32 256, 256
      %12 = vsyncadd [#allocation3], %s11
      %s14 = sshll.u32 [#allocation2], 4
      %s15 = int_to_ptr.vmem [resolvable:$true] %s14
      %17 = dma.hbm_to_vmem [thread:$0]  %s0, 256, %s15, [#allocation3]
    $region5: #{tpu_custom_call.1} parent=1 // pred_fallthru
      _
    // Predicated region
    $region6: #{tpu_custom_call.1} parent=1 // pred_check
      _
    $region7: #{tpu_custom_call.1} parent=1 // pred_check_branch
      %19 = sbr.rel (0) target = $region9
    $region8: #{tpu_custom_call.1} parent=1 // pred_region
      %20 = dma.done [#allocation3], 256
    $region9: #{tpu_custom_call.1} parent=1 // pred_fallthru
      _
    %v21 = vld [vmem:[#allocation2] sm:$0xff]
    %v22 = vld [vmem:[#allocation2 + $0x8] sm:$0xff]
    %v23 = vxor.u32 %v22, 2147483648
    %v24 = vmul.f32 %v23, 1.442695
    %v25 = vpow.pop %v24
    %v26 = vadd.f32 %v25, 1.0
    %v27 = vrcp.pop %v26
    %v28 = vmul.f32 1.0, %v27
    %v29 = vmul.f32 %v21, %v28
    %30 = vst [vmem:[#allocation5] sm:$0xff] %v29
    // Predicated region
    $region10: #{tpu_custom_call.1} parent=1 // pred_check
      _
    $region11: #{tpu_custom_call.1} parent=1 // pred_check_branch
      %32 = sbr.rel (0) target = $region13
    $region12: #{tpu_custom_call.1} parent=1 // pred_region
      %s34 = ssub.s32 128, 128
      %35 = vsyncadd [#allocation4], %s34
      %s37 = sshll.u32 [#allocation5], 4
      %s38 = int_to_ptr.vmem [resolvable:$true] %s37
      %40 = dma.vmem_to_hbm [thread:$0]  %s38, 128, %s1, [#allocation4]
    $region13: #{tpu_custom_call.1} parent=1 // pred_fallthru
      _
    // Predicated region
    $region14: #{tpu_custom_call.1} parent=1 // pred_check
      _
    $region15: #{tpu_custom_call.1} parent=1 // pred_check_branch
      %42 = sbr.rel (0) target = $region17
    $region16: #{tpu_custom_call.1} parent=1 // pred_region
      %43 = dma.done [#allocation4], 128
    $region17: #{tpu_custom_call.1} parent=1 // pred_fallthru
      _
    %44 = vsyncpa [#allocation3], 1
    %45 = vsyncpa [#allocation4], 1

</llo_original>
